<compile_context>
chip_gen: v6e
topology: v6e:2x2x1
jax: 0.10.0
libtpu: 0.0.40
codegen_flags: <defaults>
</compile_context>

<pallas_src>
import jax
import jax.numpy as jnp
from jax import lax
from jax.experimental import pallas as pl
from jax.experimental.pallas import tpu as pltpu

LEAKY_SLOPE = 0.01          # torch.nn.LeakyReLU default
BN_EPS = 1e-5               # torch.nn.BatchNorm1d default
SOFTPLUS_THRESHOLD = 20.0   # torch.nn.Softplus default (beta=1, threshold=20)
LANE = 128                  # TPU lane width


def _bn_leaky(z, g, be):
    """BatchNorm1d (train-mode batch stats) -> LeakyReLU on an (N, F) tile."""
    mean = jnp.mean(z, axis=0, keepdims=True)
    zc = z - mean
    var = jnp.mean(zc * zc, axis=0, keepdims=True)          # biased variance
    scale = g * lax.rsqrt(var + BN_EPS)                      # fused gamma*rsqrt (EUP)
    zn = zc * scale + be
    return jnp.where(zn >= 0.0, zn, LEAKY_SLOPE * zn)


def fc_positive_kernel(
    x_ref, u_ref,
    w1x_ref, w1u_ref,        # layer-1 weight, split along the input (concat) axis
    wmid_ref,                # (3, H, H): layers 2..4 weights stacked
    bn_ref,                  # (8, H): rows 0..3 gamma_1..4, rows 4..7 beta_1..4
    w5_ref, b5_ref,          # final Linear (lane-padded)
    out_ref,
):
    x = x_ref[...].astype(jnp.float32)
    u = u_ref[...].astype(jnp.float32)

    # Layer 1: fused concat -> split matmul.  Linear bias is dropped wherever a
    # BatchNorm follows (batch-mean subtraction cancels it exactly).
    z = (jnp.dot(x, w1x_ref[...], preferred_element_type=jnp.float32)
         + jnp.dot(u, w1u_ref[...], preferred_element_type=jnp.float32))
    h = _bn_leaky(z, bn_ref[0:1, :], bn_ref[4:5, :])

    # Layers 2..4 (static Python loop, fully unrolled at trace time).
    for i in range(3):
        z = jnp.dot(h, wmid_ref[i], preferred_element_type=jnp.float32)
        h = _bn_leaky(z, bn_ref[i + 1:i + 2, :], bn_ref[i + 5:i + 6, :])

    # Final Linear (bias needed here) -> Softplus (PyTorch threshold trick).
    z = jnp.dot(h, w5_ref[...], preferred_element_type=jnp.float32) + b5_ref[...]
    sp = jnp.where(z > SOFTPLUS_THRESHOLD,
                   z,
                   jnp.log1p(jnp.exp(jnp.minimum(z, SOFTPLUS_THRESHOLD))))
    out_ref[...] = sp.astype(out_ref.dtype)   # lane-dense (N, y_pad) store


def _full_spec(shape):
    # Whole-array block; grid=(1,) so index_map always returns block (0, ...).
    return pl.BlockSpec(shape, lambda i, _s=len(shape): (0,) * _s)


def pack_params(params, x_size):
    """One-time packing of the PyTorch-style params into kernel operands."""
    hidden = params["w1"].shape[1]
    y_size = params["w5"].shape[1]
    y_pad = ((y_size + LANE - 1) // LANE) * LANE
    packed = {
        "w1x": params["w1"][:x_size],
        "w1u": params["w1"][x_size:],
        "wmid": jnp.stack([params["w2"], params["w3"], params["w4"]], axis=0),
        "bn": jnp.concatenate(
            [params["g1"], params["g2"], params["g3"], params["g4"],
             params["be1"], params["be2"], params["be3"], params["be4"]],
            axis=0),                                            # (8, hidden)
        "w5": jnp.pad(params["w5"], ((0, 0), (0, y_pad - y_size))),
        "b5": jnp.pad(params["b5"], ((0, 0), (0, y_pad - y_size))),
    }
    meta = {"hidden": hidden, "y_size": y_size, "y_pad": y_pad}
    return packed, meta


@jax.jit
def _fc_positive_padded(x, u, packed):
    n, x_size = x.shape
    u_size = u.shape[1]
    hidden = packed["w1x"].shape[1]
    y_pad = packed["w5"].shape[1]

    operands = (x, u,
                packed["w1x"], packed["w1u"],
                packed["wmid"], packed["bn"],
                packed["w5"], packed["b5"])
    in_specs = [_full_spec(op.shape) for op in operands]

    flops = 2 * n * (x_size * hidden + u_size * hidden
                     + 3 * hidden * hidden + hidden * y_pad)
    transcendentals = 2 * n * y_pad + 4 * hidden        # softplus exp/log1p + BN rsqrt
    bytes_accessed = 4 * (sum(int(op.size) for op in operands) + n * y_pad)

    return pl.pallas_call(
        fc_positive_kernel,
        out_shape=jax.ShapeDtypeStruct((n, y_pad), jnp.float32),
        grid=(1,),
        in_specs=in_specs,
        out_specs=_full_spec((n, y_pad)),
        compiler_params=pltpu.CompilerParams(
            dimension_semantics=("arbitrary",)),
        cost_estimate=pl.CostEstimate(
            flops=flops,
            transcendentals=transcendentals,
            bytes_accessed=bytes_accessed),
    )(*operands)


def fc_positive_forward(x, u, packed, meta):
    """x: (N, x_size), u: (N, u_size). Returns (N, y_size) float32."""
    out_padded = _fc_positive_padded(x, u, packed)
    return out_padded[:, :meta["y_size"]]


def init_params(key, x_size, u_size, y_size, hidden_units):
    """Deterministic PyTorch-style init. Linear weights stored (in, out)."""
    in_dim = x_size + u_size
    dims = [(in_dim, hidden_units),
            (hidden_units, hidden_units),
            (hidden_units, hidden_units),
            (hidden_units, hidden_units),
            (hidden_units, y_size)]
    params = {}
    keys = jax.random.split(key, 2 * len(dims))
    for i, (fi, fo) in enumerate(dims, start=1):
        bound = 1.0 / jnp.sqrt(jnp.asarray(fi, jnp.float32))
        w = jax.random.uniform(keys[2 * (i - 1)], (fi, fo),
                               minval=-bound, maxval=bound, dtype=jnp.float32)
        b = jax.random.uniform(keys[2 * (i - 1) + 1], (1, fo),
                               minval=-bound, maxval=bound, dtype=jnp.float32)
        params[f"w{i}"] = w
        params[f"b{i}"] = b
        if i <= 4:  # BatchNorm affine params (PyTorch defaults: gamma=1, beta=0)
            params[f"g{i}"] = jnp.ones((1, fo), jnp.float32)
            params[f"be{i}"] = jnp.zeros((1, fo), jnp.float32)
    return params


def _reference_forward(x, u, params):
    """Pure-JAX reference of the PyTorch module's math (biases included)."""
    h = jnp.concatenate([x, u], axis=1)
    for i in range(1, 5):
        z = h @ params[f"w{i}"] + params[f"b{i}"]
        mean = jnp.mean(z, axis=0, keepdims=True)
        var = jnp.mean((z - mean) ** 2, axis=0, keepdims=True)
        zn = (z - mean) / jnp.sqrt(var + BN_EPS)
        zn = zn * params[f"g{i}"] + params[f"be{i}"]
        h = jnp.where(zn >= 0.0, zn, LEAKY_SLOPE * zn)
    z = h @ params["w5"] + params["b5"]
    return jnp.where(z > SOFTPLUS_THRESHOLD, z, jnp.log1p(jnp.exp(z)))


if __name__ == "__main__":
    batch = 8
    x_size, u_size, y_size = 4, 4, 4
    hidden_units = 128

    key = jax.random.PRNGKey(0)
    kp, kx, ku = jax.random.split(key, 3)
    params = init_params(kp, x_size, u_size, y_size, hidden_units)
    x = jax.random.normal(kx, (batch, x_size), dtype=jnp.float32)
    u = jax.random.normal(ku, (batch, u_size), dtype=jnp.float32)

    packed, meta = pack_params(params, x_size)

    y = fc_positive_forward(x, u, packed, meta)
    jax.block_until_ready(y)

    y_ref = _reference_forward(x, u, params)
    assert y.shape == (batch, y_size)
    assert bool(jnp.all(y >= 0.0))  # Softplus output is positive
    assert bool(jnp.allclose(y, y_ref, atol=1e-4, rtol=1e-4))

    print("KERNEL_OK")
</pallas_src>

<mosaic_0001>
module attributes {stable_mosaic.version = 11 : i64} {
  func.func @fc_positive_kernel(%arg0: i32, %arg1: memref<8x4xf32, #tpu.memory_space<vmem>>, %arg2: memref<8x4xf32, #tpu.memory_space<vmem>>, %arg3: memref<4x128xf32, #tpu.memory_space<vmem>>, %arg4: memref<4x128xf32, #tpu.memory_space<vmem>>, %arg5: memref<3x128x128xf32, #tpu.memory_space<vmem>>, %arg6: memref<8x128xf32, #tpu.memory_space<vmem>>, %arg7: memref<128x128xf32, #tpu.memory_space<vmem>>, %arg8: memref<1x128xf32, #tpu.memory_space<vmem>>, %arg9: memref<8x128xf32, #tpu.memory_space<vmem>>) attributes {dimension_semantics = [#tpu.dimension_semantics<arbitrary>], iteration_bounds = array<i64: 1>, scalar_prefetch = 0 : i64, scratch_operands = 0 : i64, tpu.core_type = #tpu.core_type<tc>, window_params = [{pipeline_mode = #tpu.pipeline_mode<synchronous>, transform_indices = @transform_0, window_bounds = array<i64: 8, 4>}, {pipeline_mode = #tpu.pipeline_mode<synchronous>, transform_indices = @transform_1, window_bounds = array<i64: 8, 4>}, {pipeline_mode = #tpu.pipeline_mode<synchronous>, transform_indices = @transform_2, window_bounds = array<i64: 4, 128>}, {pipeline_mode = #tpu.pipeline_mode<synchronous>, transform_indices = @transform_3, window_bounds = array<i64: 4, 128>}, {pipeline_mode = #tpu.pipeline_mode<synchronous>, transform_indices = @transform_4, window_bounds = array<i64: 3, 128, 128>}, {pipeline_mode = #tpu.pipeline_mode<synchronous>, transform_indices = @transform_5, window_bounds = array<i64: 8, 128>}, {pipeline_mode = #tpu.pipeline_mode<synchronous>, transform_indices = @transform_6, window_bounds = array<i64: 128, 128>}, {pipeline_mode = #tpu.pipeline_mode<synchronous>, transform_indices = @transform_7, window_bounds = array<i64: 1, 128>}, {pipeline_mode = #tpu.pipeline_mode<synchronous>, transform_indices = @transform_8, window_bounds = array<i64: 8, 128>}]} {
    %c0 = arith.constant 0 : index
    %c0_0 = arith.constant 0 : index
    %0 = vector.load %arg1[%c0, %c0_0] : memref<8x4xf32, #tpu.memory_space<vmem>>, vector<8x4xf32>
    %c0_1 = arith.constant 0 : index
    %c0_2 = arith.constant 0 : index
    %1 = vector.load %arg2[%c0_1, %c0_2] : memref<8x4xf32, #tpu.memory_space<vmem>>, vector<8x4xf32>
    %c0_3 = arith.constant 0 : index
    %c0_4 = arith.constant 0 : index
    %2 = vector.load %arg3[%c0_3, %c0_4] : memref<4x128xf32, #tpu.memory_space<vmem>>, vector<4x128xf32>
    %cst = arith.constant dense<0.000000e+00> : vector<8x128xf32>
    %3 = tpu.matmul %0, %2, %cst {dimension_numbers = #tpu.dot_dimension_numbers<[1], [0], [0], [1], [0, 0, 1, 1], [], []>} : vector<8x4xf32>, vector<4x128xf32>, vector<8x128xf32> -> vector<8x128xf32>
    %c0_5 = arith.constant 0 : index
    %c0_6 = arith.constant 0 : index
    %4 = vector.load %arg4[%c0_5, %c0_6] : memref<4x128xf32, #tpu.memory_space<vmem>>, vector<4x128xf32>
    %cst_7 = arith.constant dense<0.000000e+00> : vector<8x128xf32>
    %5 = tpu.matmul %1, %4, %cst_7 {dimension_numbers = #tpu.dot_dimension_numbers<[1], [0], [0], [1], [0, 0, 1, 1], [], []>} : vector<8x4xf32>, vector<4x128xf32>, vector<8x128xf32> -> vector<8x128xf32>
    %6 = arith.addf %3, %5 : vector<8x128xf32>
    %c0_8 = arith.constant 0 : index
    %c0_9 = arith.constant 0 : index
    %7 = vector.load %arg6[%c0_8, %c0_9] : memref<8x128xf32, #tpu.memory_space<vmem>>, vector<1x128xf32>
    %c4 = arith.constant 4 : index
    %c0_10 = arith.constant 0 : index
    %8 = vector.load %arg6[%c4, %c0_10] : memref<8x128xf32, #tpu.memory_space<vmem>>, vector<1x128xf32>
    %cst_11 = arith.constant dense<0.000000e+00> : vector<128xf32>
    %9 = vector.multi_reduction <add>, %6, %cst_11 [0] : vector<8x128xf32> to vector<128xf32>
    %10 = vector.shape_cast %9 : vector<128xf32> to vector<1x128xf32>
    %cst_12 = arith.constant 8.000000e+00 : f32
    %11 = vector.broadcast %cst_12 : f32 to vector<1x128xf32>
    %12 = arith.divf %10, %11 : vector<1x128xf32>
    %13 = vector.broadcast %12 : vector<1x128xf32> to vector<8x128xf32>
    %14 = arith.subf %6, %13 : vector<8x128xf32>
    %15 = arith.mulf %14, %14 : vector<8x128xf32>
    %cst_13 = arith.constant dense<0.000000e+00> : vector<128xf32>
    %16 = vector.multi_reduction <add>, %15, %cst_13 [0] : vector<8x128xf32> to vector<128xf32>
    %17 = vector.shape_cast %16 : vector<128xf32> to vector<1x128xf32>
    %cst_14 = arith.constant 8.000000e+00 : f32
    %18 = vector.broadcast %cst_14 : f32 to vector<1x128xf32>
    %19 = arith.divf %17, %18 : vector<1x128xf32>
    %cst_15 = arith.constant 9.99999974E-6 : f32
    %20 = vector.broadcast %cst_15 : f32 to vector<1x128xf32>
    %21 = arith.addf %19, %20 : vector<1x128xf32>
    %22 = math.rsqrt %21 : vector<1x128xf32>
    %23 = arith.mulf %7, %22 : vector<1x128xf32>
    %24 = vector.broadcast %23 : vector<1x128xf32> to vector<8x128xf32>
    %25 = arith.mulf %14, %24 : vector<8x128xf32>
    %26 = vector.broadcast %8 : vector<1x128xf32> to vector<8x128xf32>
    %27 = arith.addf %25, %26 : vector<8x128xf32>
    %cst_16 = arith.constant 0.000000e+00 : f32
    %28 = vector.broadcast %cst_16 : f32 to vector<8x128xf32>
    %29 = arith.cmpf oge, %27, %28 : vector<8x128xf32>
    %cst_17 = arith.constant 0.00999999977 : f32
    %30 = vector.broadcast %cst_17 : f32 to vector<8x128xf32>
    %31 = arith.mulf %30, %27 : vector<8x128xf32>
    %32 = arith.select %29, %27, %31 : vector<8x128xi1>, vector<8x128xf32>
    %c0_18 = arith.constant 0 : index
    %c0_19 = arith.constant 0 : index
    %c0_20 = arith.constant 0 : index
    %33 = vector.load %arg5[%c0_18, %c0_19, %c0_20] : memref<3x128x128xf32, #tpu.memory_space<vmem>>, vector<1x128x128xf32>
    %34 = vector.shape_cast %33 : vector<1x128x128xf32> to vector<128x128xf32>
    %cst_21 = arith.constant dense<0.000000e+00> : vector<8x128xf32>
    %35 = tpu.matmul %32, %34, %cst_21 {dimension_numbers = #tpu.dot_dimension_numbers<[1], [0], [0], [1], [0, 0, 1, 1], [], []>} : vector<8x128xf32>, vector<128x128xf32>, vector<8x128xf32> -> vector<8x128xf32>
    %c1 = arith.constant 1 : index
    %c0_22 = arith.constant 0 : index
    %36 = vector.load %arg6[%c1, %c0_22] : memref<8x128xf32, #tpu.memory_space<vmem>>, vector<1x128xf32>
    %c5 = arith.constant 5 : index
    %c0_23 = arith.constant 0 : index
    %37 = vector.load %arg6[%c5, %c0_23] : memref<8x128xf32, #tpu.memory_space<vmem>>, vector<1x128xf32>
    %cst_24 = arith.constant dense<0.000000e+00> : vector<128xf32>
    %38 = vector.multi_reduction <add>, %35, %cst_24 [0] : vector<8x128xf32> to vector<128xf32>
    %39 = vector.shape_cast %38 : vector<128xf32> to vector<1x128xf32>
    %cst_25 = arith.constant 8.000000e+00 : f32
    %40 = vector.broadcast %cst_25 : f32 to vector<1x128xf32>
    %41 = arith.divf %39, %40 : vector<1x128xf32>
    %42 = vector.broadcast %41 : vector<1x128xf32> to vector<8x128xf32>
    %43 = arith.subf %35, %42 : vector<8x128xf32>
    %44 = arith.mulf %43, %43 : vector<8x128xf32>
    %cst_26 = arith.constant dense<0.000000e+00> : vector<128xf32>
    %45 = vector.multi_reduction <add>, %44, %cst_26 [0] : vector<8x128xf32> to vector<128xf32>
    %46 = vector.shape_cast %45 : vector<128xf32> to vector<1x128xf32>
    %cst_27 = arith.constant 8.000000e+00 : f32
    %47 = vector.broadcast %cst_27 : f32 to vector<1x128xf32>
    %48 = arith.divf %46, %47 : vector<1x128xf32>
    %cst_28 = arith.constant 9.99999974E-6 : f32
    %49 = vector.broadcast %cst_28 : f32 to vector<1x128xf32>
    %50 = arith.addf %48, %49 : vector<1x128xf32>
    %51 = math.rsqrt %50 : vector<1x128xf32>
    %52 = arith.mulf %36, %51 : vector<1x128xf32>
    %53 = vector.broadcast %52 : vector<1x128xf32> to vector<8x128xf32>
    %54 = arith.mulf %43, %53 : vector<8x128xf32>
    %55 = vector.broadcast %37 : vector<1x128xf32> to vector<8x128xf32>
    %56 = arith.addf %54, %55 : vector<8x128xf32>
    %cst_29 = arith.constant 0.000000e+00 : f32
    %57 = vector.broadcast %cst_29 : f32 to vector<8x128xf32>
    %58 = arith.cmpf oge, %56, %57 : vector<8x128xf32>
    %cst_30 = arith.constant 0.00999999977 : f32
    %59 = vector.broadcast %cst_30 : f32 to vector<8x128xf32>
    %60 = arith.mulf %59, %56 : vector<8x128xf32>
    %61 = arith.select %58, %56, %60 : vector<8x128xi1>, vector<8x128xf32>
    %c1_31 = arith.constant 1 : index
    %c0_32 = arith.constant 0 : index
    %c0_33 = arith.constant 0 : index
    %62 = vector.load %arg5[%c1_31, %c0_32, %c0_33] : memref<3x128x128xf32, #tpu.memory_space<vmem>>, vector<1x128x128xf32>
    %63 = vector.shape_cast %62 : vector<1x128x128xf32> to vector<128x128xf32>
    %cst_34 = arith.constant dense<0.000000e+00> : vector<8x128xf32>
    %64 = tpu.matmul %61, %63, %cst_34 {dimension_numbers = #tpu.dot_dimension_numbers<[1], [0], [0], [1], [0, 0, 1, 1], [], []>} : vector<8x128xf32>, vector<128x128xf32>, vector<8x128xf32> -> vector<8x128xf32>
    %c2 = arith.constant 2 : index
    %c0_35 = arith.constant 0 : index
    %65 = vector.load %arg6[%c2, %c0_35] : memref<8x128xf32, #tpu.memory_space<vmem>>, vector<1x128xf32>
    %c6 = arith.constant 6 : index
    %c0_36 = arith.constant 0 : index
    %66 = vector.load %arg6[%c6, %c0_36] : memref<8x128xf32, #tpu.memory_space<vmem>>, vector<1x128xf32>
    %cst_37 = arith.constant dense<0.000000e+00> : vector<128xf32>
    %67 = vector.multi_reduction <add>, %64, %cst_37 [0] : vector<8x128xf32> to vector<128xf32>
    %68 = vector.shape_cast %67 : vector<128xf32> to vector<1x128xf32>
    %cst_38 = arith.constant 8.000000e+00 : f32
    %69 = vector.broadcast %cst_38 : f32 to vector<1x128xf32>
    %70 = arith.divf %68, %69 : vector<1x128xf32>
    %71 = vector.broadcast %70 : vector<1x128xf32> to vector<8x128xf32>
    %72 = arith.subf %64, %71 : vector<8x128xf32>
    %73 = arith.mulf %72, %72 : vector<8x128xf32>
    %cst_39 = arith.constant dense<0.000000e+00> : vector<128xf32>
    %74 = vector.multi_reduction <add>, %73, %cst_39 [0] : vector<8x128xf32> to vector<128xf32>
    %75 = vector.shape_cast %74 : vector<128xf32> to vector<1x128xf32>
    %cst_40 = arith.constant 8.000000e+00 : f32
    %76 = vector.broadcast %cst_40 : f32 to vector<1x128xf32>
    %77 = arith.divf %75, %76 : vector<1x128xf32>
    %cst_41 = arith.constant 9.99999974E-6 : f32
    %78 = vector.broadcast %cst_41 : f32 to vector<1x128xf32>
    %79 = arith.addf %77, %78 : vector<1x128xf32>
    %80 = math.rsqrt %79 : vector<1x128xf32>
    %81 = arith.mulf %65, %80 : vector<1x128xf32>
    %82 = vector.broadcast %81 : vector<1x128xf32> to vector<8x128xf32>
    %83 = arith.mulf %72, %82 : vector<8x128xf32>
    %84 = vector.broadcast %66 : vector<1x128xf32> to vector<8x128xf32>
    %85 = arith.addf %83, %84 : vector<8x128xf32>
    %cst_42 = arith.constant 0.000000e+00 : f32
    %86 = vector.broadcast %cst_42 : f32 to vector<8x128xf32>
    %87 = arith.cmpf oge, %85, %86 : vector<8x128xf32>
    %cst_43 = arith.constant 0.00999999977 : f32
    %88 = vector.broadcast %cst_43 : f32 to vector<8x128xf32>
    %89 = arith.mulf %88, %85 : vector<8x128xf32>
    %90 = arith.select %87, %85, %89 : vector<8x128xi1>, vector<8x128xf32>
    %c2_44 = arith.constant 2 : index
    %c0_45 = arith.constant 0 : index
    %c0_46 = arith.constant 0 : index
    %91 = vector.load %arg5[%c2_44, %c0_45, %c0_46] : memref<3x128x128xf32, #tpu.memory_space<vmem>>, vector<1x128x128xf32>
    %92 = vector.shape_cast %91 : vector<1x128x128xf32> to vector<128x128xf32>
    %cst_47 = arith.constant dense<0.000000e+00> : vector<8x128xf32>
    %93 = tpu.matmul %90, %92, %cst_47 {dimension_numbers = #tpu.dot_dimension_numbers<[1], [0], [0], [1], [0, 0, 1, 1], [], []>} : vector<8x128xf32>, vector<128x128xf32>, vector<8x128xf32> -> vector<8x128xf32>
    %c3 = arith.constant 3 : index
    %c0_48 = arith.constant 0 : index
    %94 = vector.load %arg6[%c3, %c0_48] : memref<8x128xf32, #tpu.memory_space<vmem>>, vector<1x128xf32>
    %c7 = arith.constant 7 : index
    %c0_49 = arith.constant 0 : index
    %95 = vector.load %arg6[%c7, %c0_49] : memref<8x128xf32, #tpu.memory_space<vmem>>, vector<1x128xf32>
    %cst_50 = arith.constant dense<0.000000e+00> : vector<128xf32>
    %96 = vector.multi_reduction <add>, %93, %cst_50 [0] : vector<8x128xf32> to vector<128xf32>
    %97 = vector.shape_cast %96 : vector<128xf32> to vector<1x128xf32>
    %cst_51 = arith.constant 8.000000e+00 : f32
    %98 = vector.broadcast %cst_51 : f32 to vector<1x128xf32>
    %99 = arith.divf %97, %98 : vector<1x128xf32>
    %100 = vector.broadcast %99 : vector<1x128xf32> to vector<8x128xf32>
    %101 = arith.subf %93, %100 : vector<8x128xf32>
    %102 = arith.mulf %101, %101 : vector<8x128xf32>
    %cst_52 = arith.constant dense<0.000000e+00> : vector<128xf32>
    %103 = vector.multi_reduction <add>, %102, %cst_52 [0] : vector<8x128xf32> to vector<128xf32>
    %104 = vector.shape_cast %103 : vector<128xf32> to vector<1x128xf32>
    %cst_53 = arith.constant 8.000000e+00 : f32
    %105 = vector.broadcast %cst_53 : f32 to vector<1x128xf32>
    %106 = arith.divf %104, %105 : vector<1x128xf32>
    %cst_54 = arith.constant 9.99999974E-6 : f32
    %107 = vector.broadcast %cst_54 : f32 to vector<1x128xf32>
    %108 = arith.addf %106, %107 : vector<1x128xf32>
    %109 = math.rsqrt %108 : vector<1x128xf32>
    %110 = arith.mulf %94, %109 : vector<1x128xf32>
    %111 = vector.broadcast %110 : vector<1x128xf32> to vector<8x128xf32>
    %112 = arith.mulf %101, %111 : vector<8x128xf32>
    %113 = vector.broadcast %95 : vector<1x128xf32> to vector<8x128xf32>
    %114 = arith.addf %112, %113 : vector<8x128xf32>
    %cst_55 = arith.constant 0.000000e+00 : f32
    %115 = vector.broadcast %cst_55 : f32 to vector<8x128xf32>
    %116 = arith.cmpf oge, %114, %115 : vector<8x128xf32>
    %cst_56 = arith.constant 0.00999999977 : f32
    %117 = vector.broadcast %cst_56 : f32 to vector<8x128xf32>
    %118 = arith.mulf %117, %114 : vector<8x128xf32>
    %119 = arith.select %116, %114, %118 : vector<8x128xi1>, vector<8x128xf32>
    %c0_57 = arith.constant 0 : index
    %c0_58 = arith.constant 0 : index
    %120 = vector.load %arg7[%c0_57, %c0_58] : memref<128x128xf32, #tpu.memory_space<vmem>>, vector<128x128xf32>
    %cst_59 = arith.constant dense<0.000000e+00> : vector<8x128xf32>
    %121 = tpu.matmul %119, %120, %cst_59 {dimension_numbers = #tpu.dot_dimension_numbers<[1], [0], [0], [1], [0, 0, 1, 1], [], []>} : vector<8x128xf32>, vector<128x128xf32>, vector<8x128xf32> -> vector<8x128xf32>
    %c0_60 = arith.constant 0 : index
    %c0_61 = arith.constant 0 : index
    %122 = vector.load %arg8[%c0_60, %c0_61] : memref<1x128xf32, #tpu.memory_space<vmem>>, vector<1x128xf32>
    %123 = vector.broadcast %122 : vector<1x128xf32> to vector<8x128xf32>
    %124 = arith.addf %121, %123 : vector<8x128xf32>
    %cst_62 = arith.constant 2.000000e+01 : f32
    %125 = vector.broadcast %cst_62 : f32 to vector<8x128xf32>
    %126 = arith.cmpf ogt, %124, %125 : vector<8x128xf32>
    %cst_63 = arith.constant 2.000000e+01 : f32
    %127 = vector.broadcast %cst_63 : f32 to vector<8x128xf32>
    %128 = arith.minimumf %124, %127 : vector<8x128xf32>
    %129 = math.exp %128 : vector<8x128xf32>
    %130 = math.log1p %129 : vector<8x128xf32>
    %131 = arith.select %126, %124, %130 : vector<8x128xi1>, vector<8x128xf32>
    %c0_64 = arith.constant 0 : index
    %c0_65 = arith.constant 0 : index
    %132 = vector.load %arg9[%c0_64, %c0_65] : memref<8x128xf32, #tpu.memory_space<vmem>>, vector<8x128xf32>
    tpu.vector_store %arg9[%c0_64, %c0_65], %131 {strides = array<i32>} : memref<8x128xf32, #tpu.memory_space<vmem>>, vector<8x128xf32>,
    return
  }
  func.func @transform_0(%arg0: i32) -> (i32, i32) {
    %c0_i32 = arith.constant 0 : i32
    %c0_i32_0 = arith.constant 0 : i32
    %c0_i32_1 = arith.constant 0 : i32
    return %c0_i32, %c0_i32_0 : i32, i32
  }
  func.func @transform_1(%arg0: i32) -> (i32, i32) {
    %c0_i32 = arith.constant 0 : i32
    %c0_i32_0 = arith.constant 0 : i32
    %c0_i32_1 = arith.constant 0 : i32
    return %c0_i32, %c0_i32_0 : i32, i32
  }
  func.func @transform_2(%arg0: i32) -> (i32, i32) {
    %c0_i32 = arith.constant 0 : i32
    %c0_i32_0 = arith.constant 0 : i32
    %c0_i32_1 = arith.constant 0 : i32
    return %c0_i32, %c0_i32_0 : i32, i32
  }
  func.func @transform_3(%arg0: i32) -> (i32, i32) {
    %c0_i32 = arith.constant 0 : i32
    %c0_i32_0 = arith.constant 0 : i32
    %c0_i32_1 = arith.constant 0 : i32
    return %c0_i32, %c0_i32_0 : i32, i32
  }
  func.func @transform_4(%arg0: i32) -> (i32, i32, i32) {
    %c0_i32 = arith.constant 0 : i32
    %c0_i32_0 = arith.constant 0 : i32
    %c0_i32_1 = arith.constant 0 : i32
    %c0_i32_2 = arith.constant 0 : i32
    return %c0_i32, %c0_i32_0, %c0_i32_1 : i32, i32, i32
  }
  func.func @transform_5(%arg0: i32) -> (i32, i32) {
    %c0_i32 = arith.constant 0 : i32
    %c0_i32_0 = arith.constant 0 : i32
    %c0_i32_1 = arith.constant 0 : i32
    return %c0_i32, %c0_i32_0 : i32, i32
  }
  func.func @transform_6(%arg0: i32) -> (i32, i32) {
    %c0_i32 = arith.constant 0 : i32
    %c0_i32_0 = arith.constant 0 : i32
    %c0_i32_1 = arith.constant 0 : i32
    return %c0_i32, %c0_i32_0 : i32, i32
  }
  func.func @transform_7(%arg0: i32) -> (i32, i32) {
    %c0_i32 = arith.constant 0 : i32
    %c0_i32_0 = arith.constant 0 : i32
    %c0_i32_1 = arith.constant 0 : i32
    return %c0_i32, %c0_i32_0 : i32, i32
  }
  func.func @transform_8(%arg0: i32) -> (i32, i32) {
    %c0_i32 = arith.constant 0 : i32
    %c0_i32_0 = arith.constant 0 : i32
    %c0_i32_1 = arith.constant 0 : i32
    return %c0_i32, %c0_i32_0 : i32, i32
  }
}

</mosaic_0001>

<llo_original>
// kernel: _fc_positive_padded.1
$region0: #{_fc_positive_padded.1}
  #allocation0 [shape = 'u32[]', space=smem, size = 0x4, offset = 0x4, fixed_abs, tag = 'smem constant byte address 0x4 - core index']
  #allocation1 [shape = 'u32[144,128]{1,0:T(1,128)}', space=vmem, size = 0x12000, scoped, tag = 'internal scratch']
  %s0 = inlined_call_operand.vmem [shape: f32[8,4], index: 0, kind: input, shape index: {}]
  %s1 = inlined_call_operand.vmem [shape: f32[8,4], index: 1, kind: input, shape index: {}]
  %s2 = inlined_call_operand.vmem [shape: f32[4,128], index: 2, kind: input, shape index: {}]
  %s3 = inlined_call_operand.vmem [shape: f32[4,128], index: 3, kind: input, shape index: {}]
  %s4 = inlined_call_operand.hbm [shape: f32[3,128,128], index: 4, kind: input, shape index: {}]
  %s5 = inlined_call_operand.vmem [shape: f32[8,128], index: 5, kind: input, shape index: {}]
  %s6 = inlined_call_operand.hbm [shape: f32[128,128], index: 6, kind: input, shape index: {}]
  %s7 = inlined_call_operand.vmem [shape: f32[1,128], index: 7, kind: input, shape index: {}]
  %s8 = inlined_call_operand.hbm [shape: f32[8,128], index: 8, kind: output, shape index: {}]
  %s9 = sld [smem:[#allocation0]]
  $region50: #{_fc_positive_padded.1} parent=0
    _
  %s11 = ssub.s32 1, %s9
  %s12 = scalar_select 0, %s11, %s9
  $region1: #{_fc_positive_padded.1} parent=0
    #allocation2 [shape = 'u8[196608]{0}', space=vmem, size = 0x30000, scoped, tag = 'input window, operand 4, single buffered']
    #allocation3 [shape = 's32[1]{0}', space=sflag, size = 0x4, scoped, tag = 'scoped memory for _fc_positive_padded.1']
    #allocation4 [shape = 's32[1]{0}', space=sflag, size = 0x4, scoped, tag = 'scoped memory for _fc_positive_padded.1']
    #allocation5 [shape = 'u8[65536]{0}', space=vmem, size = 0x10000, scoped, tag = 'input window, operand 6, single buffered']
    #allocation6 [shape = 's32[1]{0}', space=sflag, size = 0x4, scoped, tag = 'scoped memory for _fc_positive_padded.1']
    #allocation7 [shape = 'u8[4096]{0}', space=vmem, size = 0x1000, scoped, tag = 'output window, operand 0, single buffered']
    %13 = vsyncpa [#allocation3], 0
    %14 = vsyncpa [#allocation6], 0
    %15 = vsyncpa [#allocation4], 0
    // Predicated region
    $region2: #{_fc_positive_padded.1} parent=1 // pred_check
      _
    $region3: #{_fc_positive_padded.1} parent=1 // pred_check_branch
      %17 = sbr.rel (0) target = $region5
    $region4: #{_fc_positive_padded.1} parent=1 // pred_region
      _
    $region5: #{_fc_positive_padded.1} parent=1 // pred_fallthru
      _
    // Predicated region
    $region6: #{_fc_positive_padded.1} parent=1 // pred_check
      _
    $region7: #{_fc_positive_padded.1} parent=1 // pred_check_branch
      %19 = sbr.rel (0) target = $region9
    $region8: #{_fc_positive_padded.1} parent=1 // pred_region
      _
    $region9: #{_fc_positive_padded.1} parent=1 // pred_fallthru
      _
    // Predicated region
    $region10: #{_fc_positive_padded.1} parent=1 // pred_check
      _
    $region11: #{_fc_positive_padded.1} parent=1 // pred_check_branch
      %21 = sbr.rel (0) target = $region13
    $region12: #{_fc_positive_padded.1} parent=1 // pred_region
      _
    $region13: #{_fc_positive_padded.1} parent=1 // pred_fallthru
      _
    // Predicated region
    $region14: #{_fc_positive_padded.1} parent=1 // pred_check
      _
    $region15: #{_fc_positive_padded.1} parent=1 // pred_check_branch
      %23 = sbr.rel (0) target = $region17
    $region16: #{_fc_positive_padded.1} parent=1 // pred_region
      _
    $region17: #{_fc_positive_padded.1} parent=1 // pred_fallthru
      _
    // Predicated region
    $region18: #{_fc_positive_padded.1} parent=1 // pred_check
      _
    $region19: #{_fc_positive_padded.1} parent=1 // pred_check_branch
      %25 = sbr.rel (0) target = $region21
    $region20: #{_fc_positive_padded.1} parent=1 // pred_region
      %s27 = ssub.s32 6144, 6144
      %28 = vsyncadd [#allocation3], %s27
      %s29 = sshll.u32 [#allocation2], 4
      %s30 = int_to_ptr.vmem [resolvable:$true] %s29
      %35 = dma.hbm_to_vmem [thread:$0]  %s4, 6144, %s30, [#allocation3], 128, 128, 8
    $region21: #{_fc_positive_padded.1} parent=1 // pred_fallthru
      _
    // Predicated region
    $region22: #{_fc_positive_padded.1} parent=1 // pred_check
      _
    $region23: #{_fc_positive_padded.1} parent=1 // pred_check_branch
      %37 = sbr.rel (0) target = $region25
    $region24: #{_fc_positive_padded.1} parent=1 // pred_region
      _
    $region25: #{_fc_positive_padded.1} parent=1 // pred_fallthru
      _
    // Predicated region
    $region26: #{_fc_positive_padded.1} parent=1 // pred_check
      _
    $region27: #{_fc_positive_padded.1} parent=1 // pred_check_branch
      %39 = sbr.rel (0) target = $region29
    $region28: #{_fc_positive_padded.1} parent=1 // pred_region
      %s41 = ssub.s32 2048, 2048
      %42 = vsyncadd [#allocation6], %s41
      %s43 = sshll.u32 [#allocation5], 4
      %s44 = int_to_ptr.vmem [resolvable:$true] %s43
      %49 = dma.hbm_to_vmem [thread:$0]  %s6, 2048, %s44, [#allocation6], 128, 128, 8
    $region29: #{_fc_positive_padded.1} parent=1 // pred_fallthru
      _
    // Predicated region
    $region30: #{_fc_positive_padded.1} parent=1 // pred_check
      _
    $region31: #{_fc_positive_padded.1} parent=1 // pred_check_branch
      %51 = sbr.rel (0) target = $region33
    $region32: #{_fc_positive_padded.1} parent=1 // pred_region
      _
    $region33: #{_fc_positive_padded.1} parent=1 // pred_fallthru
      _
    // Predicated region
    $region34: #{_fc_positive_padded.1} parent=1 // pred_check
      _
    $region35: #{_fc_positive_padded.1} parent=1 // pred_check_branch
      %53 = sbr.rel (0) target = $region37
    $region36: #{_fc_positive_padded.1} parent=1 // pred_region
      %54 = dma.done [#allocation3], 6144
    $region37: #{_fc_positive_padded.1} parent=1 // pred_fallthru
      _
    // Predicated region
    $region38: #{_fc_positive_padded.1} parent=1 // pred_check
      _
    $region39: #{_fc_positive_padded.1} parent=1 // pred_check_branch
      %56 = sbr.rel (0) target = $region41
    $region40: #{_fc_positive_padded.1} parent=1 // pred_region
      %57 = dma.done [#allocation6], 2048
    $region41: #{_fc_positive_padded.1} parent=1 // pred_fallthru
      _
    %v58 = vld [vmem:[%s0] sm:$0xff]
    %v59 = vld [vmem:[%s1] sm:$0xff]
    %v60 = vld [vmem:[%s2] sm:$0xf]
    %v61 = vld [vmem:[%s3] sm:$0xf]
    %vm62 = vcmask 31744
    %v64 = vsel %vm62, %v59, 0
    %vm66 = vcmask 1043456
    %v68 = vsel %vm66, %v61, 0
    %70 = vmatprep.subr.mxu0 0.0
    %71 = vmatpush1.msra.mxu0 0.0
    %72 = vmatprep.subr.mxu0 0.0
    %73 = vmatpush1.msra.mxu0 0.0
    %74 = vmatprep.subr.mxu0 0.0
    %75 = vmatpush1.msra.mxu0 0.0
    %76 = vmatprep.subr.mxu0 0.0
    %77 = vmatpush1.msra.mxu0 0.0
    %78 = vmatprep.subr.mxu0 0.0
    %79 = vmatpush1.msra.mxu0 0.0
    %80 = vmatprep.subr.mxu0 0.0
    %81 = vmatpush1.msra.mxu0 0.0
    %82 = vmatprep.subr.mxu0 0.0
    %83 = vmatpush1.msra.mxu0 0.0
    %84 = vmatprep.subr.mxu0 0.0
    %85 = vmatpush1.msra.mxu0 0.0
    %86 = vmatprep.subr.mxu0 0.0
    %87 = vmatpush1.msra.mxu0 0.0
    %88 = vmatprep.subr.mxu0 0.0
    %89 = vmatpush1.msra.mxu0 0.0
    %90 = vmatprep.subr.mxu0 0.0
    %91 = vmatpush1.msra.mxu0 0.0
    %92 = vmatprep.subr.mxu0 0.0
    %93 = vmatpush1.msra.mxu0 0.0
    %94 = vmatprep.subr.mxu0 0.0
    %95 = vmatpush1.msra.mxu0 0.0
    %96 = vmatprep.subr.mxu0 0.0
    %97 = vmatpush1.msra.mxu0 0.0
    %98 = vmatprep.subr.mxu0 0.0
    %99 = vmatpush1.msra.mxu0 0.0
    %100 = vmatprep.subr.mxu0 0.0
    %101 = vmatpush1.msra.mxu0 %v68
    %102 = vmatprep.subr.mxu0 0.0
    %103 = vmatpush2.msra.mxu0 0.0
    %104 = vmatprep.subr.mxu0 0.0
    %105 = vmatpush2.msra.mxu0 0.0
    %106 = vmatprep.subr.mxu0 0.0
    %107 = vmatpush2.msra.mxu0 0.0
    %108 = vmatprep.subr.mxu0 0.0
    %109 = vmatpush2.msra.mxu0 0.0
    %110 = vmatprep.subr.mxu0 0.0
    %111 = vmatpush2.msra.mxu0 0.0
    %112 = vmatprep.subr.mxu0 0.0
    %113 = vmatpush2.msra.mxu0 0.0
    %114 = vmatprep.subr.mxu0 0.0
    %115 = vmatpush2.msra.mxu0 0.0
    %116 = vmatprep.subr.mxu0 0.0
    %117 = vmatpush2.msra.mxu0 0.0
    %118 = vmatprep.subr.mxu0 0.0
    %119 = vmatpush2.msra.mxu0 0.0
    %120 = vmatprep.subr.mxu0 0.0
    %121 = vmatpush2.msra.mxu0 0.0
    %122 = vmatprep.subr.mxu0 0.0
    %123 = vmatpush2.msra.mxu0 0.0
    %124 = vmatprep.subr.mxu0 0.0
    %125 = vmatpush2.msra.mxu0 0.0
    %126 = vmatprep.subr.mxu0 0.0
    %127 = vmatpush2.msra.mxu0 0.0
    %128 = vmatprep.subr.mxu0 0.0
    %129 = vmatpush2.msra.mxu0 0.0
    %130 = vmatprep.subr.mxu0 0.0
    %131 = vmatpush2.msra.mxu0 0.0
    %132 = vmatprep.subr.mxu0 0.0
    %133 = vmatpush2.msra.mxu0 0.0
    %134 = vmatprep.mubr.f32.mxu0 0.0
    %135 = vmatmul.mubr.f32.gmra.mxu0 %v64
    %v136 = vpop.f32.mrf.mxu0
    %v137 = vadd.f32 0.0, %v136
    %v138 = vpop.f32.mrf.mxu0
    %139 = vdwg.mxu0
    %v141 = vsel %vm62, %v58, 0
    %v144 = vsel %vm66, %v60, 0
    %146 = vmatprep.subr.mxu0 0.0
    %147 = vmatpush1.msra.mxu0 0.0
    %148 = vmatprep.subr.mxu0 0.0
    %149 = vmatpush1.msra.mxu0 0.0
    %150 = vmatprep.subr.mxu0 0.0
    %151 = vmatpush1.msra.mxu0 0.0
    %152 = vmatprep.subr.mxu0 0.0
    %153 = vmatpush1.msra.mxu0 0.0
    %154 = vmatprep.subr.mxu0 0.0
    %155 = vmatpush1.msra.mxu0 0.0
    %156 = vmatprep.subr.mxu0 0.0
    %157 = vmatpush1.msra.mxu0 0.0
    %158 = vmatprep.subr.mxu0 0.0
    %159 = vmatpush1.msra.mxu0 0.0
    %160 = vmatprep.subr.mxu0 0.0
    %161 = vmatpush1.msra.mxu0 0.0
    %162 = vmatprep.subr.mxu0 0.0
    %163 = vmatpush1.msra.mxu0 0.0
    %164 = vmatprep.subr.mxu0 0.0
    %165 = vmatpush1.msra.mxu0 0.0
    %166 = vmatprep.subr.mxu0 0.0
    %167 = vmatpush1.msra.mxu0 0.0
    %168 = vmatprep.subr.mxu0 0.0
    %169 = vmatpush1.msra.mxu0 0.0
    %170 = vmatprep.subr.mxu0 0.0
    %171 = vmatpush1.msra.mxu0 0.0
    %172 = vmatprep.subr.mxu0 0.0
    %173 = vmatpush1.msra.mxu0 0.0
    %174 = vmatprep.subr.mxu0 0.0
    %175 = vmatpush1.msra.mxu0 0.0
    %176 = vmatprep.subr.mxu0 0.0
    %177 = vmatpush1.msra.mxu0 %v144
    %178 = vmatprep.subr.mxu0 0.0
    %179 = vmatpush2.msra.mxu0 0.0
    %180 = vmatprep.subr.mxu0 0.0
    %181 = vmatpush2.msra.mxu0 0.0
    %182 = vmatprep.subr.mxu0 0.0
    %183 = vmatpush2.msra.mxu0 0.0
    %184 = vmatprep.subr.mxu0 0.0
    %185 = vmatpush2.msra.mxu0 0.0
    %186 = vmatprep.subr.mxu0 0.0
    %187 = vmatpush2.msra.mxu0 0.0
    %188 = vmatprep.subr.mxu0 0.0
    %189 = vmatpush2.msra.mxu0 0.0
    %190 = vmatprep.subr.mxu0 0.0
    %191 = vmatpush2.msra.mxu0 0.0
    %192 = vmatprep.subr.mxu0 0.0
    %193 = vmatpush2.msra.mxu0 0.0
    %194 = vmatprep.subr.mxu0 0.0
    %195 = vmatpush2.msra.mxu0 0.0
    %196 = vmatprep.subr.mxu0 0.0
    %197 = vmatpush2.msra.mxu0 0.0
    %198 = vmatprep.subr.mxu0 0.0
    %199 = vmatpush2.msra.mxu0 0.0
    %200 = vmatprep.subr.mxu0 0.0
    %201 = vmatpush2.msra.mxu0 0.0
    %202 = vmatprep.subr.mxu0 0.0
    %203 = vmatpush2.msra.mxu0 0.0
    %204 = vmatprep.subr.mxu0 0.0
    %205 = vmatpush2.msra.mxu0 0.0
    %206 = vmatprep.subr.mxu0 0.0
    %207 = vmatpush2.msra.mxu0 0.0
    %208 = vmatprep.subr.mxu0 0.0
    %209 = vmatpush2.msra.mxu0 0.0
    %210 = vmatprep.mubr.f32.mxu0 0.0
    %211 = vmatmul.mubr.f32.gmra.mxu0 %v141
    %v212 = vpop.f32.mrf.mxu0
    %v213 = vadd.f32 %v137, %v212
    %v214 = vpop.f32.mrf.mxu0
    %215 = vdwg.mxu0
    %v216 = vld [vmem:[%s5] sm:$0x1]
    %v217 = vld [vmem:[%s5 + $0x4] sm:$0x1]
    %v218 = vrot.slane %v213, 4
    %v219 = vadd.f32 %v213, %v218
    %v220 = vrot.slane %v219, 2
    %v221 = vadd.f32 %v219, %v220
    %v222 = vrot.slane %v221, 1
    %v223 = vadd.f32 %v221, %v222
    %v224 = vrcp.pop 8.0
    %v225 = vmul.f32 %v223, %v224
    %v226 = vsub.f32 %v213, %v225
    %v227 = vmul.f32 %v226, %v226
    %v228 = vrot.slane %v227, 4
    %v229 = vadd.f32 %v227, %v228
    %v230 = vrot.slane %v229, 2
    %v231 = vadd.f32 %v229, %v230
    %v232 = vrot.slane %v231, 1
    %v233 = vadd.f32 %v231, %v232
    %v234 = vmul.f32 %v233, %v224
    %v235 = vadd.f32 %v234, 1e-05
    %v236 = vrsqrt.pop %v235
    %v237 = vmul.f32 %v216, %v236
    %v238 = vlaneseq
    %v239 = vshrl.u32 %v238, 7
    %v240 = vsub.s32 0, %v239
    %v241 = vrot.slane %v237, %v240
    %v242 = vmul.f32 %v226, %v241
    %v243 = vlaneseq
    %v244 = vshrl.u32 %v243, 7
    %v245 = vsub.s32 0, %v244
    %v246 = vrot.slane %v217, %v245
    %v247 = vadd.f32 %v242, %v246
    %vm248 = vcmp.ge.f32.partialorder %v247, 0.0
    %v249 = vmul.f32 %v247, 0.01
    %v250 = vsel %vm248, %v247, %v249
    %v251 = vld [vmem:[#allocation2] sm:$0xff]
    %v252 = vld [vmem:[#allocation2 + $0x8] sm:$0xff]
    %v253 = vld [vmem:[#allocation2 + $0x10] sm:$0xff]
    %v254 = vld [vmem:[#allocation2 + $0x18] sm:$0xff]
    %v255 = vld [vmem:[#allocation2 + $0x20] sm:$0xff]
    %v256 = vld [vmem:[#allocation2 + $0x28] sm:$0xff]
    %v257 = vld [vmem:[#allocation2 + $0x30] sm:$0xff]
    %v258 = vld [vmem:[#allocation2 + $0x38] sm:$0xff]
    %v259 = vld [vmem:[#allocation2 + $0x40] sm:$0xff]
    %v260 = vld [vmem:[#allocation2 + $0x48] sm:$0xff]
    %v261 = vld [vmem:[#allocation2 + $0x50] sm:$0xff]
    %v262 = vld [vmem:[#allocation2 + $0x58] sm:$0xff]
    %v263 = vld [vmem:[#allocation2 + $0x60] sm:$0xff]
    %v264 = vld [vmem:[#allocation2 + $0x68] sm:$0xff]
    %v265 = vld [vmem:[#allocation2 + $0x70] sm:$0xff]
    %v266 = vld [vmem:[#allocation2 + $0x78] sm:$0xff]
    %267 = vmatprep.subr.mxu0 0.0
    %268 = vmatpush1.msra.mxu0 %v266
    %269 = vmatprep.subr.mxu0 0.0
    %270 = vmatpush1.msra.mxu0 %v265
    %271 = vmatprep.subr.mxu0 0.0
    %272 = vmatpush1.msra.mxu0 %v264
    %273 = vmatprep.subr.mxu0 0.0
    %274 = vmatpush1.msra.mxu0 %v263
    %275 = vmatprep.subr.mxu0 0.0
    %276 = vmatpush1.msra.mxu0 %v262
    %277 = vmatprep.subr.mxu0 0.0
    %278 = vmatpush1.msra.mxu0 %v261
    %279 = vmatprep.subr.mxu0 0.0
    %280 = vmatpush1.msra.mxu0 %v260
    %281 = vmatprep.subr.mxu0 0.0
    %282 = vmatpush1.msra.mxu0 %v259
    %283 = vmatprep.subr.mxu0 0.0
    %284 = vmatpush1.msra.mxu0 %v258
    %285 = vmatprep.subr.mxu0 0.0
    %286 = vmatpush1.msra.mxu0 %v257
    %287 = vmatprep.subr.mxu0 0.0
    %288 = vmatpush1.msra.mxu0 %v256
    %289 = vmatprep.subr.mxu0 0.0
    %290 = vmatpush1.msra.mxu0 %v255
    %291 = vmatprep.subr.mxu0 0.0
    %292 = vmatpush1.msra.mxu0 %v254
    %293 = vmatprep.subr.mxu0 0.0
    %294 = vmatpush1.msra.mxu0 %v253
    %295 = vmatprep.subr.mxu0 0.0
    %296 = vmatpush1.msra.mxu0 %v252
    %297 = vmatprep.subr.mxu0 0.0
    %298 = vmatpush1.msra.mxu0 %v251
    %299 = vmatprep.subr.mxu0 0.0
    %300 = vmatpush2.msra.mxu0 0.0
    %301 = vmatprep.subr.mxu0 0.0
    %302 = vmatpush2.msra.mxu0 0.0
    %303 = vmatprep.subr.mxu0 0.0
    %304 = vmatpush2.msra.mxu0 0.0
    %305 = vmatprep.subr.mxu0 0.0
    %306 = vmatpush2.msra.mxu0 0.0
    %307 = vmatprep.subr.mxu0 0.0
    %308 = vmatpush2.msra.mxu0 0.0
    %309 = vmatprep.subr.mxu0 0.0
    %310 = vmatpush2.msra.mxu0 0.0
    %311 = vmatprep.subr.mxu0 0.0
    %312 = vmatpush2.msra.mxu0 0.0
    %313 = vmatprep.subr.mxu0 0.0
    %314 = vmatpush2.msra.mxu0 0.0
    %315 = vmatprep.subr.mxu0 0.0
    %316 = vmatpush2.msra.mxu0 0.0
    %317 = vmatprep.subr.mxu0 0.0
    %318 = vmatpush2.msra.mxu0 0.0
    %319 = vmatprep.subr.mxu0 0.0
    %320 = vmatpush2.msra.mxu0 0.0
    %321 = vmatprep.subr.mxu0 0.0
    %322 = vmatpush2.msra.mxu0 0.0
    %323 = vmatprep.subr.mxu0 0.0
    %324 = vmatpush2.msra.mxu0 0.0
    %325 = vmatprep.subr.mxu0 0.0
    %326 = vmatpush2.msra.mxu0 0.0
    %327 = vmatprep.subr.mxu0 0.0
    %328 = vmatpush2.msra.mxu0 0.0
    %329 = vmatprep.subr.mxu0 0.0
    %330 = vmatpush2.msra.mxu0 0.0
    %331 = vmatprep.mubr.f32.mxu0 0.0
    %332 = vmatmul.mubr.f32.gmra.mxu0 %v250
    %v333 = vpop.f32.mrf.mxu0
    %v334 = vadd.f32 0.0, %v333
    %v335 = vpop.f32.mrf.mxu0
    %336 = vdwg.mxu0
    %v337 = vld [vmem:[%s5 + $0x1] sm:$0x1]
    %v338 = vld [vmem:[%s5 + $0x5] sm:$0x1]
    %v339 = vrot.slane %v334, 4
    %v340 = vadd.f32 %v334, %v339
    %v341 = vrot.slane %v340, 2
    %v342 = vadd.f32 %v340, %v341
    %v343 = vrot.slane %v342, 1
    %v344 = vadd.f32 %v342, %v343
    %v345 = vmul.f32 %v344, %v224
    %v346 = vsub.f32 %v334, %v345
    %v347 = vmul.f32 %v346, %v346
    %v348 = vrot.slane %v347, 4
    %v349 = vadd.f32 %v347, %v348
    %v350 = vrot.slane %v349, 2
    %v351 = vadd.f32 %v349, %v350
    %v352 = vrot.slane %v351, 1
    %v353 = vadd.f32 %v351, %v352
    %v354 = vmul.f32 %v353, %v224
    %v355 = vadd.f32 %v354, 1e-05
    %v356 = vrsqrt.pop %v355
    %v357 = vmul.f32 %v337, %v356
    %v358 = vlaneseq
    %v359 = vshrl.u32 %v358, 7
    %v360 = vsub.s32 0, %v359
    %v361 = vrot.slane %v357, %v360
    %v362 = vmul.f32 %v346, %v361
    %v363 = vlaneseq
    %v364 = vshrl.u32 %v363, 7
    %v365 = vsub.s32 0, %v364
    %v366 = vrot.slane %v338, %v365
    %v367 = vadd.f32 %v362, %v366
    %vm368 = vcmp.ge.f32.partialorder %v367, 0.0
    %v369 = vmul.f32 %v367, 0.01
    %v370 = vsel %vm368, %v367, %v369
    %s371 = scalar_lea.vmem [#allocation2], 128
    %v372 = vld [vmem:[%s371] sm:$0xff]
    %v373 = vld [vmem:[%s371 + $0x8] sm:$0xff]
    %v374 = vld [vmem:[%s371 + $0x10] sm:$0xff]
    %v375 = vld [vmem:[%s371 + $0x18] sm:$0xff]
    %v376 = vld [vmem:[%s371 + $0x20] sm:$0xff]
    %v377 = vld [vmem:[%s371 + $0x28] sm:$0xff]
    %v378 = vld [vmem:[%s371 + $0x30] sm:$0xff]
    %v379 = vld [vmem:[%s371 + $0x38] sm:$0xff]
    %v380 = vld [vmem:[%s371 + $0x40] sm:$0xff]
    %v381 = vld [vmem:[%s371 + $0x48] sm:$0xff]
    %v382 = vld [vmem:[%s371 + $0x50] sm:$0xff]
    %v383 = vld [vmem:[%s371 + $0x58] sm:$0xff]
    %v384 = vld [vmem:[%s371 + $0x60] sm:$0xff]
    %v385 = vld [vmem:[%s371 + $0x68] sm:$0xff]
    %v386 = vld [vmem:[%s371 + $0x70] sm:$0xff]
    %v387 = vld [vmem:[%s371 + $0x78] sm:$0xff]
    %388 = vmatprep.subr.mxu0 0.0
    %389 = vmatpush1.msra.mxu0 %v387
    %390 = vmatprep.subr.mxu0 0.0
    %391 = vmatpush1.msra.mxu0 %v386
    %392 = vmatprep.subr.mxu0 0.0
    %393 = vmatpush1.msra.mxu0 %v385
    %394 = vmatprep.subr.mxu0 0.0
    %395 = vmatpush1.msra.mxu0 %v384
    %396 = vmatprep.subr.mxu0 0.0
    %397 = vmatpush1.msra.mxu0 %v383
    %398 = vmatprep.subr.mxu0 0.0
    %399 = vmatpush1.msra.mxu0 %v382
    %400 = vmatprep.subr.mxu0 0.0
    %401 = vmatpush1.msra.mxu0 %v381
    %402 = vmatprep.subr.mxu0 0.0
    %403 = vmatpush1.msra.mxu0 %v380
    %404 = vmatprep.subr.mxu0 0.0
    %405 = vmatpush1.msra.mxu0 %v379
    %406 = vmatprep.subr.mxu0 0.0
    %407 = vmatpush1.msra.mxu0 %v378
    %408 = vmatprep.subr.mxu0 0.0
    %409 = vmatpush1.msra.mxu0 %v377
    %410 = vmatprep.subr.mxu0 0.0
    %411 = vmatpush1.msra.mxu0 %v376
    %412 = vmatprep.subr.mxu0 0.0
    %413 = vmatpush1.msra.mxu0 %v375
    %414 = vmatprep.subr.mxu0 0.0
    %415 = vmatpush1.msra.mxu0 %v374
    %416 = vmatprep.subr.mxu0 0.0
    %417 = vmatpush1.msra.mxu0 %v373
    %418 = vmatprep.subr.mxu0 0.0
    %419 = vmatpush1.msra.mxu0 %v372
    %420 = vmatprep.subr.mxu0 0.0
    %421 = vmatpush2.msra.mxu0 0.0
    %422 = vmatprep.subr.mxu0 0.0
    %423 = vmatpush2.msra.mxu0 0.0
    %424 = vmatprep.subr.mxu0 0.0
    %425 = vmatpush2.msra.mxu0 0.0
    %426 = vmatprep.subr.mxu0 0.0
    %427 = vmatpush2.msra.mxu0 0.0
    %428 = vmatprep.subr.mxu0 0.0
    %429 = vmatpush2.msra.mxu0 0.0
    %430 = vmatprep.subr.mxu0 0.0
    %431 = vmatpush2.msra.mxu0 0.0
    %432 = vmatprep.subr.mxu0 0.0
    %433 = vmatpush2.msra.mxu0 0.0
    %434 = vmatprep.subr.mxu0 0.0
    %435 = vmatpush2.msra.mxu0 0.0
    %436 = vmatprep.subr.mxu0 0.0
    %437 = vmatpush2.msra.mxu0 0.0
    %438 = vmatprep.subr.mxu0 0.0
    %439 = vmatpush2.msra.mxu0 0.0
    %440 = vmatprep.subr.mxu0 0.0
    %441 = vmatpush2.msra.mxu0 0.0
    %442 = vmatprep.subr.mxu0 0.0
    %443 = vmatpush2.msra.mxu0 0.0
    %444 = vmatprep.subr.mxu0 0.0
    %445 = vmatpush2.msra.mxu0 0.0
    %446 = vmatprep.subr.mxu0 0.0
    %447 = vmatpush2.msra.mxu0 0.0
    %448 = vmatprep.subr.mxu0 0.0
    %449 = vmatpush2.msra.mxu0 0.0
    %450 = vmatprep.subr.mxu0 0.0
    %451 = vmatpush2.msra.mxu0 0.0
    %452 = vmatprep.mubr.f32.mxu0 0.0
    %453 = vmatmul.mubr.f32.gmra.mxu0 %v370
    %v454 = vpop.f32.mrf.mxu0
    %v455 = vadd.f32 0.0, %v454
    %v456 = vpop.f32.mrf.mxu0
    %457 = vdwg.mxu0
    %v458 = vld [vmem:[%s5 + $0x2] sm:$0x1]
    %v459 = vld [vmem:[%s5 + $0x6] sm:$0x1]
    %v460 = vrot.slane %v455, 4
    %v461 = vadd.f32 %v455, %v460
    %v462 = vrot.slane %v461, 2
    %v463 = vadd.f32 %v461, %v462
    %v464 = vrot.slane %v463, 1
    %v465 = vadd.f32 %v463, %v464
    %v466 = vmul.f32 %v465, %v224
    %v467 = vsub.f32 %v455, %v466
    %v468 = vmul.f32 %v467, %v467
    %v469 = vrot.slane %v468, 4
    %v470 = vadd.f32 %v468, %v469
    %v471 = vrot.slane %v470, 2
    %v472 = vadd.f32 %v470, %v471
    %v473 = vrot.slane %v472, 1
    %v474 = vadd.f32 %v472, %v473
    %v475 = vmul.f32 %v474, %v224
    %v476 = vadd.f32 %v475, 1e-05
    %v477 = vrsqrt.pop %v476
    %v478 = vmul.f32 %v458, %v477
    %v479 = vlaneseq
    %v480 = vshrl.u32 %v479, 7
    %v481 = vsub.s32 0, %v480
    %v482 = vrot.slane %v478, %v481
    %v483 = vmul.f32 %v467, %v482
    %v484 = vlaneseq
    %v485 = vshrl.u32 %v484, 7
    %v486 = vsub.s32 0, %v485
    %v487 = vrot.slane %v459, %v486
    %v488 = vadd.f32 %v483, %v487
    %vm489 = vcmp.ge.f32.partialorder %v488, 0.0
    %v490 = vmul.f32 %v488, 0.01
    %v491 = vsel %vm489, %v488, %v490
    %s492 = scalar_lea.vmem [#allocation2], 256
    %v493 = vld [vmem:[%s492] sm:$0xff]
    %v494 = vld [vmem:[%s492 + $0x8] sm:$0xff]
    %v495 = vld [vmem:[%s492 + $0x10] sm:$0xff]
    %v496 = vld [vmem:[%s492 + $0x18] sm:$0xff]
    %v497 = vld [vmem:[%s492 + $0x20] sm:$0xff]
    %v498 = vld [vmem:[%s492 + $0x28] sm:$0xff]
    %v499 = vld [vmem:[%s492 + $0x30] sm:$0xff]
    %v500 = vld [vmem:[%s492 + $0x38] sm:$0xff]
    %v501 = vld [vmem:[%s492 + $0x40] sm:$0xff]
    %v502 = vld [vmem:[%s492 + $0x48] sm:$0xff]
    %v503 = vld [vmem:[%s492 + $0x50] sm:$0xff]
    %v504 = vld [vmem:[%s492 + $0x58] sm:$0xff]
    %v505 = vld [vmem:[%s492 + $0x60] sm:$0xff]
    %v506 = vld [vmem:[%s492 + $0x68] sm:$0xff]
    %v507 = vld [vmem:[%s492 + $0x70] sm:$0xff]
    %v508 = vld [vmem:[%s492 + $0x78] sm:$0xff]
    %509 = vmatprep.subr.mxu0 0.0
    %510 = vmatpush1.msra.mxu0 %v508
    %511 = vmatprep.subr.mxu0 0.0
    %512 = vmatpush1.msra.mxu0 %v507
    %513 = vmatprep.subr.mxu0 0.0
    %514 = vmatpush1.msra.mxu0 %v506
    %515 = vmatprep.subr.mxu0 0.0
    %516 = vmatpush1.msra.mxu0 %v505
    %517 = vmatprep.subr.mxu0 0.0
    %518 = vmatpush1.msra.mxu0 %v504
    %519 = vmatprep.subr.mxu0 0.0
    %520 = vmatpush1.msra.mxu0 %v503
    %521 = vmatprep.subr.mxu0 0.0
    %522 = vmatpush1.msra.mxu0 %v502
    %523 = vmatprep.subr.mxu0 0.0
    %524 = vmatpush1.msra.mxu0 %v501
    %525 = vmatprep.subr.mxu0 0.0
    %526 = vmatpush1.msra.mxu0 %v500
    %527 = vmatprep.subr.mxu0 0.0
    %528 = vmatpush1.msra.mxu0 %v499
    %529 = vmatprep.subr.mxu0 0.0
    %530 = vmatpush1.msra.mxu0 %v498
    %531 = vmatprep.subr.mxu0 0.0
    %532 = vmatpush1.msra.mxu0 %v497
    %533 = vmatprep.subr.mxu0 0.0
    %534 = vmatpush1.msra.mxu0 %v496
    %535 = vmatprep.subr.mxu0 0.0
    %536 = vmatpush1.msra.mxu0 %v495
    %537 = vmatprep.subr.mxu0 0.0
    %538 = vmatpush1.msra.mxu0 %v494
    %539 = vmatprep.subr.mxu0 0.0
    %540 = vmatpush1.msra.mxu0 %v493
    %541 = vmatprep.subr.mxu0 0.0
    %542 = vmatpush2.msra.mxu0 0.0
    %543 = vmatprep.subr.mxu0 0.0
    %544 = vmatpush2.msra.mxu0 0.0
    %545 = vmatprep.subr.mxu0 0.0
    %546 = vmatpush2.msra.mxu0 0.0
    %547 = vmatprep.subr.mxu0 0.0
    %548 = vmatpush2.msra.mxu0 0.0
    %549 = vmatprep.subr.mxu0 0.0
    %550 = vmatpush2.msra.mxu0 0.0
    %551 = vmatprep.subr.mxu0 0.0
    %552 = vmatpush2.msra.mxu0 0.0
    %553 = vmatprep.subr.mxu0 0.0
    %554 = vmatpush2.msra.mxu0 0.0
    %555 = vmatprep.subr.mxu0 0.0
    %556 = vmatpush2.msra.mxu0 0.0
    %557 = vmatprep.subr.mxu0 0.0
    %558 = vmatpush2.msra.mxu0 0.0
    %559 = vmatprep.subr.mxu0 0.0
    %560 = vmatpush2.msra.mxu0 0.0
    %561 = vmatprep.subr.mxu0 0.0
    %562 = vmatpush2.msra.mxu0 0.0
    %563 = vmatprep.subr.mxu0 0.0
    %564 = vmatpush2.msra.mxu0 0.0
    %565 = vmatprep.subr.mxu0 0.0
    %566 = vmatpush2.msra.mxu0 0.0
    %567 = vmatprep.subr.mxu0 0.0
    %568 = vmatpush2.msra.mxu0 0.0
    %569 = vmatprep.subr.mxu0 0.0
    %570 = vmatpush2.msra.mxu0 0.0
    %571 = vmatprep.subr.mxu0 0.0
    %572 = vmatpush2.msra.mxu0 0.0
    %573 = vmatprep.mubr.f32.mxu0 0.0
    %574 = vmatmul.mubr.f32.gmra.mxu0 %v491
    %v575 = vpop.f32.mrf.mxu0
    %v576 = vadd.f32 0.0, %v575
    %v577 = vpop.f32.mrf.mxu0
    %578 = vdwg.mxu0
    %v579 = vld [vmem:[%s5 + $0x3] sm:$0x1]
    %v580 = vld [vmem:[%s5 + $0x7] sm:$0x1]
    %v581 = vrot.slane %v576, 4
    %v582 = vadd.f32 %v576, %v581
    %v583 = vrot.slane %v582, 2
    %v584 = vadd.f32 %v582, %v583
    %v585 = vrot.slane %v584, 1
    %v586 = vadd.f32 %v584, %v585
    %v587 = vmul.f32 %v586, %v224
    %v588 = vsub.f32 %v576, %v587
    %v589 = vmul.f32 %v588, %v588
    %v590 = vrot.slane %v589, 4
    %v591 = vadd.f32 %v589, %v590
    %v592 = vrot.slane %v591, 2
    %v593 = vadd.f32 %v591, %v592
    %v594 = vrot.slane %v593, 1
    %v595 = vadd.f32 %v593, %v594
    %v596 = vmul.f32 %v595, %v224
    %v597 = vadd.f32 %v596, 1e-05
    %v598 = vrsqrt.pop %v597
    %v599 = vmul.f32 %v579, %v598
    %v600 = vlaneseq
    %v601 = vshrl.u32 %v600, 7
    %v602 = vsub.s32 0, %v601
    %v603 = vrot.slane %v599, %v602
    %v604 = vmul.f32 %v588, %v603
    %v605 = vlaneseq
    %v606 = vshrl.u32 %v605, 7
    %v607 = vsub.s32 0, %v606
    %v608 = vrot.slane %v580, %v607
    %v609 = vadd.f32 %v604, %v608
    %vm610 = vcmp.ge.f32.partialorder %v609, 0.0
    %v611 = vmul.f32 %v609, 0.01
    %v612 = vsel %vm610, %v609, %v611
    %v613 = vld [vmem:[#allocation5] sm:$0xff]
    %v614 = vld [vmem:[#allocation5 + $0x8] sm:$0xff]
    %v615 = vld [vmem:[#allocation5 + $0x10] sm:$0xff]
    %v616 = vld [vmem:[#allocation5 + $0x18] sm:$0xff]
    %v617 = vld [vmem:[#allocation5 + $0x20] sm:$0xff]
    %v618 = vld [vmem:[#allocation5 + $0x28] sm:$0xff]
    %v619 = vld [vmem:[#allocation5 + $0x30] sm:$0xff]
    %v620 = vld [vmem:[#allocation5 + $0x38] sm:$0xff]
    %v621 = vld [vmem:[#allocation5 + $0x40] sm:$0xff]
    %v622 = vld [vmem:[#allocation5 + $0x48] sm:$0xff]
    %v623 = vld [vmem:[#allocation5 + $0x50] sm:$0xff]
    %v624 = vld [vmem:[#allocation5 + $0x58] sm:$0xff]
    %v625 = vld [vmem:[#allocation5 + $0x60] sm:$0xff]
    %v626 = vld [vmem:[#allocation5 + $0x68] sm:$0xff]
    %v627 = vld [vmem:[#allocation5 + $0x70] sm:$0xff]
    %v628 = vld [vmem:[#allocation5 + $0x78] sm:$0xff]
    %v629 = vld [vmem:[%s7] sm:$0x1]
    %v631 = vlaneseq
    %v632 = vshrl.u32 %v631, 7
    %v633 = vsub.s32 0, %v632
    %v634 = vrot.slane %v629, %v633
    %636 = vmatprep.subr.mxu0 0.0
    %637 = vmatpush1.msra.mxu0 %v628
    %638 = vmatprep.subr.mxu0 0.0
    %639 = vmatpush1.msra.mxu0 %v627
    %640 = vmatprep.subr.mxu0 0.0
    %641 = vmatpush1.msra.mxu0 %v626
    %642 = vmatprep.subr.mxu0 0.0
    %643 = vmatpush1.msra.mxu0 %v625
    %644 = vmatprep.subr.mxu0 0.0
    %645 = vmatpush1.msra.mxu0 %v624
    %646 = vmatprep.subr.mxu0 0.0
    %647 = vmatpush1.msra.mxu0 %v623
    %648 = vmatprep.subr.mxu0 0.0
    %649 = vmatpush1.msra.mxu0 %v622
    %650 = vmatprep.subr.mxu0 0.0
    %651 = vmatpush1.msra.mxu0 %v621
    %652 = vmatprep.subr.mxu0 0.0
    %653 = vmatpush1.msra.mxu0 %v620
    %654 = vmatprep.subr.mxu0 0.0
    %655 = vmatpush1.msra.mxu0 %v619
    %656 = vmatprep.subr.mxu0 0.0
    %657 = vmatpush1.msra.mxu0 %v618
    %658 = vmatprep.subr.mxu0 0.0
    %659 = vmatpush1.msra.mxu0 %v617
    %660 = vmatprep.subr.mxu0 0.0
    %661 = vmatpush1.msra.mxu0 %v616
    %662 = vmatprep.subr.mxu0 0.0
    %663 = vmatpush1.msra.mxu0 %v615
    %664 = vmatprep.subr.mxu0 0.0
    %665 = vmatpush1.msra.mxu0 %v614
    %666 = vmatprep.subr.mxu0 0.0
    %667 = vmatpush1.msra.mxu0 %v613
    %668 = vmatprep.subr.mxu0 0.0
    %669 = vmatpush2.msra.mxu0 0.0
    %670 = vmatprep.subr.mxu0 0.0
    %671 = vmatpush2.msra.mxu0 0.0
    %672 = vmatprep.subr.mxu0 0.0
    %673 = vmatpush2.msra.mxu0 0.0
    %674 = vmatprep.subr.mxu0 0.0
    %675 = vmatpush2.msra.mxu0 0.0
    %676 = vmatprep.subr.mxu0 0.0
    %677 = vmatpush2.msra.mxu0 0.0
    %678 = vmatprep.subr.mxu0 0.0
    %679 = vmatpush2.msra.mxu0 0.0
    %680 = vmatprep.subr.mxu0 0.0
    %681 = vmatpush2.msra.mxu0 0.0
    %682 = vmatprep.subr.mxu0 0.0
    %683 = vmatpush2.msra.mxu0 0.0
    %684 = vmatprep.subr.mxu0 0.0
    %685 = vmatpush2.msra.mxu0 0.0
    %686 = vmatprep.subr.mxu0 0.0
    %687 = vmatpush2.msra.mxu0 0.0
    %688 = vmatprep.subr.mxu0 0.0
    %689 = vmatpush2.msra.mxu0 0.0
    %690 = vmatprep.subr.mxu0 0.0
    %691 = vmatpush2.msra.mxu0 0.0
    %692 = vmatprep.subr.mxu0 0.0
    %693 = vmatpush2.msra.mxu0 0.0
    %694 = vmatprep.subr.mxu0 0.0
    %695 = vmatpush2.msra.mxu0 0.0
    %696 = vmatprep.subr.mxu0 0.0
    %697 = vmatpush2.msra.mxu0 0.0
    %698 = vmatprep.subr.mxu0 0.0
    %699 = vmatpush2.msra.mxu0 0.0
    %700 = vmatprep.mubr.f32.mxu0 0.0
    %701 = vmatmul.mubr.f32.gmra.mxu0 %v612
    %v702 = vpop.f32.mrf.mxu0
    %v703 = vadd.f32 %v634, %v702
    %v704 = vpop.f32.mrf.mxu0
    %705 = vdwg.mxu0
    %vm706 = vcmp.gt.f32.partialorder %v703, 20.0
    %v707 = vmin.f32 %v703, 20.0
    %v708 = vmul.f32 %v707, 1.442695
    %v709 = vpow.pop %v708
    %v710 = vadd.f32 %v709, 1.0
    %v711 = vlog2.pop %v710
    %v712 = vmul.f32 %v711, 0.6931472
    %v713 = vmul.f32 -0.5, %v709
    %v714 = vadd.f32 %v713, 1.0
    %v715 = vmul.f32 %v714, %v709
    %v716 = vand.u32 2147483647, %v709
    %vm717 = vcmp.lt.f32.partialorder %v716, 0.0004427343
    %v718 = vsel %vm717, %v715, %v712
    %v719 = vsel %vm706, %v703, %v718
    %720 = vst [vmem:[#allocation7] sm:$0xff] %v719
    // Predicated region
    $region42: #{_fc_positive_padded.1} parent=1 // pred_check
      _
    $region43: #{_fc_positive_padded.1} parent=1 // pred_check_branch
      %722 = sbr.rel (0) target = $region45
    $region44: #{_fc_positive_padded.1} parent=1 // pred_region
      %s724 = ssub.s32 128, 128
      %725 = vsyncadd [#allocation4], %s724
      %s727 = sshll.u32 [#allocation7], 4
      %s728 = int_to_ptr.vmem [resolvable:$true] %s727
      %730 = dma.vmem_to_hbm [thread:$0]  %s728, 128, %s8, [#allocation4]
    $region45: #{_fc_positive_padded.1} parent=1 // pred_fallthru
      _
    // Predicated region
    $region46: #{_fc_positive_padded.1} parent=1 // pred_check
      _
    $region47: #{_fc_positive_padded.1} parent=1 // pred_check_branch
      %732 = sbr.rel (0) target = $region49
    $region48: #{_fc_positive_padded.1} parent=1 // pred_region
      %733 = dma.done [#allocation4], 128
    $region49: #{_fc_positive_padded.1} parent=1 // pred_fallthru
      _
    %734 = vsyncpa [#allocation3], 1
    %735 = vsyncpa [#allocation6], 1
    %736 = vsyncpa [#allocation4], 1

</llo_original>
